<compile_context>
chip_gen: v7x
topology: tpu7x:2x2x1
jax: 0.10.0
libtpu: 0.0.40
codegen_flags: <defaults>
</compile_context>

<pallas_src>
import functools

import jax
import jax.numpy as jnp
from jax.experimental import pallas as pl
from jax.experimental.pallas import tpu as pltpu


# ----------------------------------------------------------------------------
# Kernels
# ----------------------------------------------------------------------------
def _lerp_residual_kernel(scale_ref, x_ref, fc_ref, o_ref, *, eps):
    # All math in f32 (inputs may be bf16).
    x = x_ref[...].astype(jnp.float32)       # (tm, D)  residual stream
    f = fc_ref[...].astype(jnp.float32)      # (tm, D)  fc(x) output
    s = scale_ref[...].astype(jnp.float32)   # (1, D)   per-channel lerp weight
    eps_sq = eps * eps

    # F.normalize(v): v / max(||v||, eps) == v * rsqrt(max(||v||^2, eps^2)).
    # rsqrt runs on the EUP on a tiny (tm, 1) operand; no full-tile divides.
    inv_f = jax.lax.rsqrt(
        jnp.maximum(jnp.sum(f * f, axis=-1, keepdims=True), eps_sq))
    f_hat = f * inv_f

    # torch.lerp(x, f_hat, s) = x + s * (f_hat - x)
    out = x + s * (f_hat - x)

    # final L2 normalize
    inv_o = jax.lax.rsqrt(
        jnp.maximum(jnp.sum(out * out, axis=-1, keepdims=True), eps_sq))
    o_ref[...] = (out * inv_o).astype(o_ref.dtype)


def _fused_proj_lerp_kernel(scale_ref, x_ref, h_ref, w_ref, o_ref, acc_ref,
                            *, eps):
    # fc_out = hidden @ w_proj accumulated over the K grid axis, then the
    # norm -> lerp -> norm epilogue on the last K step.
    k = pl.program_id(1)

    @pl.when(k == 0)
    def _():
        acc_ref[...] = jnp.zeros_like(acc_ref)

    acc_ref[...] += jnp.dot(h_ref[...], w_ref[...],
                            preferred_element_type=jnp.float32)

    @pl.when(k == pl.num_programs(1) - 1)
    def _():
        x = x_ref[...].astype(jnp.float32)
        f = acc_ref[...]
        s = scale_ref[...].astype(jnp.float32)
        eps_sq = eps * eps
        inv_f = jax.lax.rsqrt(
            jnp.maximum(jnp.sum(f * f, axis=-1, keepdims=True), eps_sq))
        f_hat = f * inv_f
        out = x + s * (f_hat - x)
        inv_o = jax.lax.rsqrt(
            jnp.maximum(jnp.sum(out * out, axis=-1, keepdims=True), eps_sq))
        o_ref[...] = (out * inv_o).astype(o_ref.dtype)


# ----------------------------------------------------------------------------
# VMEM budgeting (generation-aware)
# ----------------------------------------------------------------------------
def _vmem_capacity_bytes():
    try:
        info = pltpu.get_tpu_info()
        cap = getattr(info, "vmem_capacity_bytes", None)
        if cap:
            return int(cap)
    except Exception:
        pass
    return 64 * 1024 * 1024   # conservative fallback: v7x physical VMEM


def _vmem_limit_bytes():
    # Half of physical VMEM as scoped limit, capped at 64 MiB:
    # v5e/v6e (128 MiB phys) -> 64 MiB, v7x (64 MiB phys) -> 32 MiB.
    return int(min(64 * 1024 * 1024, _vmem_capacity_bytes() // 2))


def _pick_block_rows(n_rows, dim, itemsize, budget):
    """Row tile sized from the VMEM budget, incl. f32 compute temporaries."""
    if n_rows <= 8:
        return n_rows
    # 3 streamed double-buffered arrays (x, fc_out, out): 6 * tm * D * itemsize
    # f32 compute temporaries (x, f, f_hat, out)        : ~4 * tm * D * 4
    denom = dim * (6 * itemsize + 16)
    tm = budget // max(denom, 1)
    tm = min(tm, 1024, n_rows)
    tm = max(8, (tm // 8) * 8)
    if tm >= n_rows:
        return n_rows
    # Prefer an even grid length so v7x's two TensorCores split rows evenly.
    nblk = (n_rows + tm - 1) // tm
    if nblk > 1 and nblk % 2 == 1:
        tm_alt = (n_rows + nblk) // (nblk + 1)          # ceil(n_rows/(nblk+1))
        tm_alt = max(8, ((tm_alt + 7) // 8) * 8)
        if tm_alt < n_rows and ((n_rows + tm_alt - 1) // tm_alt) % 2 == 0:
            tm = tm_alt
    return tm


# ----------------------------------------------------------------------------
# Wrappers
# ----------------------------------------------------------------------------
def lerp_residual_post_fc(x, fc_out, scale, *, eps=1e-6, block_rows=None,
                          donate_x=False):
    """Fused: l2norm(fc_out) -> lerp(x, ., scale) -> l2norm(.)

    x, fc_out: (..., D)   scale: (D,) per-channel lerp weight.
    """
    orig_shape = x.shape
    D = orig_shape[-1]
    x2 = x.reshape(-1, D)
    f2 = fc_out.reshape(-1, D)
    M = x2.shape[0]
    scale2 = jnp.asarray(scale, jnp.float32).reshape(1, D)

    # Lane-dense output stores: pad embedding dim to a multiple of 128 when
    # needed.  Zero padding is exact (pad channels contribute 0 to the L2
    # sums and stay 0 through the lerp).
    # TODO(synk): prefer padding n_embd at the model level to avoid this copy.
    Dp = D if D % 128 == 0 else ((D + 127) // 128) * 128
    if Dp != D:
        pad = ((0, 0), (0, Dp - D))
        x2 = jnp.pad(x2, pad)
        f2 = jnp.pad(f2, pad)
        scale2 = jnp.pad(scale2, pad)

    vmem_limit = _vmem_limit_bytes()
    tm = block_rows if block_rows is not None else _pick_block_rows(
        M, Dp, jnp.dtype(x.dtype).itemsize, int(0.6 * vmem_limit))
    grid = (pl.cdiv(M, tm),)

    # Optionally donate x's buffer as the output (residual stream replaced).
    aliases = {1: 0} if (donate_x and Dp == D) else {}

    kernel = functools.partial(_lerp_residual_kernel, eps=float(eps))
    out = pl.pallas_call(
        kernel,
        out_shape=jax.ShapeDtypeStruct((M, Dp), x.dtype),
        grid_spec=pltpu.PrefetchScalarGridSpec(
            num_scalar_prefetch=0,
            grid=grid,
            in_specs=[
                pl.BlockSpec((1, Dp), lambda i: (0, 0)),    # scale (resident)
                pl.BlockSpec((tm, Dp), lambda i: (i, 0)),   # x (residual)
                pl.BlockSpec((tm, Dp), lambda i: (i, 0)),   # fc_out
            ],
            out_specs=pl.BlockSpec((tm, Dp), lambda i: (i, 0)),
        ),
        input_output_aliases=aliases,
        compiler_params=pltpu.CompilerParams(
            dimension_semantics=("parallel",),
            vmem_limit_bytes=vmem_limit,
        ),
    )(scale2, x2, f2)
    if Dp != D:
        out = out[:, :D]
    return out.reshape(orig_shape)


def lerp_residual_fused_proj(x, hidden, w_proj, scale, *, eps=1e-6,
                             block_rows=None, block_k=None):
    """Fused variant that also pulls fc's final projection matmul in-kernel.

    fc_out = hidden @ w_proj is computed with a K-axis accumulator; the
    norm -> lerp -> norm epilogue runs on the last K step.  Removes the
    fc_out HBM round trip (~2*M*D*itemsize of traffic).
    """
    orig_shape = x.shape
    D = orig_shape[-1]
    K = hidden.shape[-1]
    assert w_proj.shape == (K, D)
    x2 = x.reshape(-1, D)
    h2 = hidden.reshape(-1, K)
    M = x2.shape[0]
    scale2 = jnp.asarray(scale, jnp.float32).reshape(1, D)

    # K tile must divide K exactly (garbage padding would corrupt the matmul
    # accumulation).
    if block_k is None:
        block_k = K
        for cand in (512, 256, 128):
            if K % cand == 0:
                block_k = cand
                break
    tk = block_k
    assert K % tk == 0, "block_k must evenly divide the hidden dimension"

    vmem_limit = _vmem_limit_bytes()
    if block_rows is None:
        itemsize = jnp.dtype(x.dtype).itemsize
        # 2x hidden bufs + (2x x + 2x out) bufs + f32 acc + f32 temps.
        denom = 2 * tk * itemsize + 4 * D * itemsize + D * (4 + 16)
        tm = int(0.6 * vmem_limit) // max(denom, 1)
        tm = min(tm, 1024, M)
        tm = max(8, (tm // 8) * 8)
    else:
        tm = block_rows
    tm = min(tm, M)

    grid = (pl.cdiv(M, tm), K // tk)

    kernel = functools.partial(_fused_proj_lerp_kernel, eps=float(eps))
    out = pl.pallas_call(
        kernel,
        out_shape=jax.ShapeDtypeStruct((M, D), x.dtype),
        grid_spec=pltpu.PrefetchScalarGridSpec(
            num_scalar_prefetch=0,
            grid=grid,
            in_specs=[
                pl.BlockSpec((1, D), lambda i, k: (0, 0)),    # scale (resident)
                pl.BlockSpec((tm, D), lambda i, k: (i, 0)),   # x (residual)
                pl.BlockSpec((tm, tk), lambda i, k: (i, k)),  # hidden
                pl.BlockSpec((tk, D), lambda i, k: (k, 0)),   # w_proj
            ],
            out_specs=pl.BlockSpec((tm, D), lambda i, k: (i, 0)),
            scratch_shapes=[pltpu.VMEM((tm, D), jnp.float32)],
        ),
        compiler_params=pltpu.CompilerParams(
            dimension_semantics=("parallel", "arbitrary"),
            vmem_limit_bytes=vmem_limit,
        ),
    )(scale2, x2, h2, w_proj)
    return out.reshape(orig_shape)


# ----------------------------------------------------------------------------
# Module wrapper (matches PyTorch Lerp_Residual semantics)
# ----------------------------------------------------------------------------
class LerpResidualJAX:
    """JAX/Pallas equivalent of the PyTorch Lerp_Residual module."""

    def __init__(self, n_embd, index_layer, fc, eps=1e-6):
        init_scale = 0.05 / (index_layer + 1)
        base_scale = n_embd ** (-0.5)
        # Scale module: params = ones(dim) * base_scale, divide_scale = init/base
        self.params = jnp.ones((n_embd,), jnp.float32) * base_scale
        self.divide_scale = init_scale / base_scale
        self.fc = fc
        self.eps = eps

    def scale(self):
        return self.params * self.divide_scale

    def __call__(self, x, **kwargs):
        # TODO(synk): `fc` is an arbitrary submodule (attention/MLP) in nGPT;
        # it runs outside the kernel (use lerp_residual_fused_proj to fuse its
        # final output projection when available).
        fc_out = self.fc(x, **kwargs)
        return lerp_residual_post_fc(x, fc_out, self.scale(), eps=self.eps)


def _l2norm_ref(v, eps=1e-6):
    n = jnp.sqrt(jnp.sum(v.astype(jnp.float32) ** 2, axis=-1, keepdims=True))
    return (v / jnp.maximum(n, eps)).astype(v.dtype)


if __name__ == "__main__":
    key = jax.random.PRNGKey(0)
    k_x, k_w = jax.random.split(key)

    batch, seq, n_embd = 2, 8, 32
    x = jax.random.normal(k_x, (batch, seq, n_embd), dtype=jnp.float32)

    # Simple deterministic stand-in for the wrapped `fc` submodule.
    W = jax.random.normal(k_w, (n_embd, n_embd), dtype=jnp.float32) / jnp.sqrt(n_embd)
    fc = lambda v: v @ W

    module = LerpResidualJAX(n_embd, index_layer=0, fc=fc)
    y = jax.block_until_ready(module(x))

    # Pure-JAX reference (same math as the PyTorch forward).
    s = module.scale()
    out_ref = _l2norm_ref(fc(x))
    out_ref = x + s * (out_ref - x)
    out_ref = _l2norm_ref(out_ref)

    assert y.shape == x.shape
    assert jnp.allclose(y, out_ref, atol=1e-5, rtol=1e-5)

    # Fused-projection variant: here fc is a single linear, so hidden == x.
    y_fused = jax.block_until_ready(
        lerp_residual_fused_proj(x, x, W, module.scale(), eps=module.eps))
    assert y_fused.shape == x.shape
    assert jnp.allclose(y_fused, out_ref, atol=1e-5, rtol=1e-5)

    print("KERNEL_OK")
</pallas_src>

<mosaic_0001>
module attributes {stable_mosaic.version = 11 : i64} {
  func.func @_lerp_residual_kernel(%arg0: i32, %arg1: memref<1x128xf32, #tpu.memory_space<vmem>>, %arg2: memref<16x128xf32, #tpu.memory_space<vmem>>, %arg3: memref<16x128xf32, #tpu.memory_space<vmem>>, %arg4: memref<16x128xf32, #tpu.memory_space<vmem>>) attributes {dimension_semantics = [#tpu.dimension_semantics<parallel>], iteration_bounds = array<i64: 1>, scalar_prefetch = 0 : i64, scratch_operands = 0 : i64, tpu.core_type = #tpu.core_type<tc>, window_params = [{pipeline_mode = #tpu.pipeline_mode<synchronous>, transform_indices = @transform_0, window_bounds = array<i64: 1, 128>}, {transform_indices = @transform_1, window_bounds = array<i64: 16, 128>}, {transform_indices = @transform_2, window_bounds = array<i64: 16, 128>}, {transform_indices = @transform_3, window_bounds = array<i64: 16, 128>}]} {
    %c0 = arith.constant 0 : index
    %c0_0 = arith.constant 0 : index
    %0 = vector.load %arg2[%c0, %c0_0] : memref<16x128xf32, #tpu.memory_space<vmem>>, vector<16x128xf32>
    %c0_1 = arith.constant 0 : index
    %c0_2 = arith.constant 0 : index
    %1 = vector.load %arg3[%c0_1, %c0_2] : memref<16x128xf32, #tpu.memory_space<vmem>>, vector<16x128xf32>
    %c0_3 = arith.constant 0 : index
    %c0_4 = arith.constant 0 : index
    %2 = vector.load %arg1[%c0_3, %c0_4] : memref<1x128xf32, #tpu.memory_space<vmem>>, vector<1x128xf32>
    %3 = arith.mulf %1, %1 : vector<16x128xf32>
    %cst = arith.constant dense<0.000000e+00> : vector<16xf32>
    %4 = vector.multi_reduction <add>, %3, %cst [1] : vector<16x128xf32> to vector<16xf32>
    %5 = vector.shape_cast %4 : vector<16xf32> to vector<16x1xf32>
    %cst_5 = arith.constant 9.99999996E-13 : f32
    %6 = vector.broadcast %cst_5 : f32 to vector<16x1xf32>
    %7 = arith.maximumf %5, %6 : vector<16x1xf32>
    %8 = math.rsqrt %7 : vector<16x1xf32>
    %9 = vector.broadcast %8 : vector<16x1xf32> to vector<16x128xf32>
    %10 = arith.mulf %1, %9 : vector<16x128xf32>
    %11 = arith.subf %10, %0 : vector<16x128xf32>
    %12 = vector.broadcast %2 : vector<1x128xf32> to vector<16x128xf32>
    %13 = arith.mulf %12, %11 : vector<16x128xf32>
    %14 = arith.addf %0, %13 : vector<16x128xf32>
    %15 = arith.mulf %14, %14 : vector<16x128xf32>
    %cst_6 = arith.constant dense<0.000000e+00> : vector<16xf32>
    %16 = vector.multi_reduction <add>, %15, %cst_6 [1] : vector<16x128xf32> to vector<16xf32>
    %17 = vector.shape_cast %16 : vector<16xf32> to vector<16x1xf32>
    %cst_7 = arith.constant 9.99999996E-13 : f32
    %18 = vector.broadcast %cst_7 : f32 to vector<16x1xf32>
    %19 = arith.maximumf %17, %18 : vector<16x1xf32>
    %20 = math.rsqrt %19 : vector<16x1xf32>
    %21 = vector.broadcast %20 : vector<16x1xf32> to vector<16x128xf32>
    %22 = arith.mulf %14, %21 : vector<16x128xf32>
    %c0_8 = arith.constant 0 : index
    %c0_9 = arith.constant 0 : index
    %23 = vector.load %arg4[%c0_8, %c0_9] : memref<16x128xf32, #tpu.memory_space<vmem>>, vector<16x128xf32>
    tpu.vector_store %arg4[%c0_8, %c0_9], %22 {strides = array<i32>} : memref<16x128xf32, #tpu.memory_space<vmem>>, vector<16x128xf32>,
    return
  }
  func.func @transform_0(%arg0: i32) -> (i32, i32) {
    %c0_i32 = arith.constant 0 : i32
    %c0_i32_0 = arith.constant 0 : i32
    %c0_i32_1 = arith.constant 0 : i32
    return %c0_i32, %c0_i32_0 : i32, i32
  }
  func.func @transform_1(%arg0: i32) -> (i32, i32) {
    %c0_i32 = arith.constant 0 : i32
    %c0_i32_0 = arith.constant 0 : i32
    return %arg0, %c0_i32 : i32, i32
  }
  func.func @transform_2(%arg0: i32) -> (i32, i32) {
    %c0_i32 = arith.constant 0 : i32
    %c0_i32_0 = arith.constant 0 : i32
    return %arg0, %c0_i32 : i32, i32
  }
  func.func @transform_3(%arg0: i32) -> (i32, i32) {
    %c0_i32 = arith.constant 0 : i32
    %c0_i32_0 = arith.constant 0 : i32
    return %arg0, %c0_i32 : i32, i32
  }
}

</mosaic_0001>

<llo_original>
// kernel: tpu_custom_call.1
$region0: #{tpu_custom_call.1}
  #allocation0 [shape = 'u32[]', space=smem, size = 0x4, offset = 0x4, fixed_abs, tag = 'smem constant byte address 0x4 - core index']
  #allocation1 [shape = 'u32[144,128]{1,0:T(1,128)}', space=vmem, size = 0x12000, scoped, tag = 'internal scratch']
  %s0 = inlined_call_operand.hbm [shape: f32[1,128], index: 0, kind: input, shape index: {}]
  %s1 = inlined_call_operand.hbm [shape: f32[16,128], index: 1, kind: input, shape index: {}]
  %s2 = inlined_call_operand.hbm [shape: f32[16,128], index: 2, kind: input, shape index: {}]
  %s3 = inlined_call_operand.hbm [shape: f32[16,128], index: 3, kind: output, shape index: {}]
  %s4 = sld [smem:[#allocation0]]
  $region34: #{tpu_custom_call.1} parent=0
    _
  %s6 = ssub.s32 1, %s4
  %s7 = scalar_select 0, %s6, %s4
  $region1: #{tpu_custom_call.1} parent=0
    #allocation2 [shape = 'u8[512]{0}', space=vmem, size = 0x400, scoped, tag = 'input window, operand 0, single buffered']
    #allocation3 [shape = 's32[1]{0}', space=sflag, size = 0x4, scoped, tag = 'scoped memory for tpu_custom_call.1']
    #allocation4 [shape = 's32[1]{0}', space=sflag, size = 0x4, scoped, tag = 'scoped memory for tpu_custom_call.1']
    #allocation5 [shape = 'u8[8192]{0}', space=vmem, size = 0x2000, scoped, tag = 'input window, operand 1, single buffered']
    #allocation6 [shape = 's32[1]{0}', space=sflag, size = 0x4, scoped, tag = 'scoped memory for tpu_custom_call.1']
    #allocation7 [shape = 'u8[8192]{0}', space=vmem, size = 0x2000, scoped, tag = 'input window, operand 2, single buffered']
    #allocation8 [shape = 'u8[8192]{0}', space=vmem, size = 0x2000, scoped, tag = 'output window, operand 0, single buffered']
    %8 = vsyncpa [#allocation3], 0
    %9 = vsyncpa [#allocation6], 0
    %10 = vsyncpa [#allocation4], 0
    // Predicated region
    $region2: #{tpu_custom_call.1} parent=1 // pred_check
      _
    $region3: #{tpu_custom_call.1} parent=1 // pred_check_branch
      %12 = sbr.rel (0) target = $region5
    $region4: #{tpu_custom_call.1} parent=1 // pred_region
      %s14 = ssub.s32 16, 16
      %15 = vsyncadd [#allocation3], %s14
      %s17 = sshll.u32 [#allocation2], 4
      %s18 = int_to_ptr.vmem [resolvable:$true] %s17
      %20 = dma.hbm_to_vmem [thread:$0]  %s0, 16, %s18, [#allocation3]
    $region5: #{tpu_custom_call.1} parent=1 // pred_fallthru
      _
    // Predicated region
    $region6: #{tpu_custom_call.1} parent=1 // pred_check
      _
    $region7: #{tpu_custom_call.1} parent=1 // pred_check_branch
      %22 = sbr.rel (0) target = $region9
    $region8: #{tpu_custom_call.1} parent=1 // pred_region
      %s24 = ssub.s32 256, 256
      %25 = vsyncadd [#allocation6], %s24
      %s26 = sshll.u32 [#allocation5], 4
      %s27 = int_to_ptr.vmem [resolvable:$true] %s26
      %32 = dma.hbm_to_vmem [thread:$0]  %s1, 256, %s27, [#allocation6], 128, 128, 8
    $region9: #{tpu_custom_call.1} parent=1 // pred_fallthru
      _
    // Predicated region
    $region10: #{tpu_custom_call.1} parent=1 // pred_check
      _
    $region11: #{tpu_custom_call.1} parent=1 // pred_check_branch
      %34 = sbr.rel (0) target = $region13
    $region12: #{tpu_custom_call.1} parent=1 // pred_region
      %s36 = ssub.s32 256, 256
      %37 = vsyncadd [#allocation6], %s36
      %s38 = sshll.u32 [#allocation7], 4
      %s39 = int_to_ptr.vmem [resolvable:$true] %s38
      %44 = dma.hbm_to_vmem [thread:$0]  %s2, 256, %s39, [#allocation6], 128, 128, 8
    $region13: #{tpu_custom_call.1} parent=1 // pred_fallthru
      _
    // Predicated region
    $region14: #{tpu_custom_call.1} parent=1 // pred_check
      _
    $region15: #{tpu_custom_call.1} parent=1 // pred_check_branch
      %46 = sbr.rel (0) target = $region17
    $region16: #{tpu_custom_call.1} parent=1 // pred_region
      %47 = dma.done [#allocation3], 16
    $region17: #{tpu_custom_call.1} parent=1 // pred_fallthru
      _
    // Predicated region
    $region18: #{tpu_custom_call.1} parent=1 // pred_check
      _
    $region19: #{tpu_custom_call.1} parent=1 // pred_check_branch
      %49 = sbr.rel (0) target = $region21
    $region20: #{tpu_custom_call.1} parent=1 // pred_region
      %50 = dma.done [#allocation6], 256
    $region21: #{tpu_custom_call.1} parent=1 // pred_fallthru
      _
    // Predicated region
    $region22: #{tpu_custom_call.1} parent=1 // pred_check
      _
    $region23: #{tpu_custom_call.1} parent=1 // pred_check_branch
      %52 = sbr.rel (0) target = $region25
    $region24: #{tpu_custom_call.1} parent=1 // pred_region
      %53 = dma.done [#allocation6], 256
    $region25: #{tpu_custom_call.1} parent=1 // pred_fallthru
      _
    %v54 = vld [vmem:[#allocation5] sm:$0xff]
    %v55 = vld [vmem:[#allocation5 + $0x8] sm:$0xff]
    %v56 = vld [vmem:[#allocation7] sm:$0xff]
    %v57 = vld [vmem:[#allocation7 + $0x8] sm:$0xff]
    %v58 = vld [vmem:[#allocation2] sm:$0x1]
    %v59 = vmul.f32 %v56, %v56
    %v60 = vmul.f32 %v57, %v57
    %61 = vadd.xlane.f32.xlu0 %v59
    %v62 = vpop.xlane.xlu0 %61
    %63 = vadd.xlane.f32.xlu0 %v60
    %v64 = vpop.xlane.xlu0 %63
    %v65 = vmax.f32 %v62, 1e-12
    %v66 = vmax.f32 %v64, 1e-12
    %v67 = vrsqrt.pop %v65
    %v68 = vrsqrt.pop %v66
    %v69 = vmul.f32 %v56, %v67
    %v70 = vmul.f32 %v57, %v68
    %v71 = vsub.f32 %v69, %v54
    %v72 = vsub.f32 %v70, %v55
    %v74 = vlaneseq
    %v75 = vshrl.u32 %v74, 7
    %v76 = vsub.s32 0, %v75
    %v77 = vrot.slane %v58, %v76
    %v79 = vmul.f32 %v77, %v71
    %v80 = vmul.f32 %v77, %v72
    %v81 = vadd.f32 %v54, %v79
    %v82 = vadd.f32 %v55, %v80
    %v83 = vmul.f32 %v81, %v81
    %v84 = vmul.f32 %v82, %v82
    %85 = vadd.xlane.f32.xlu0 %v83
    %v86 = vpop.xlane.xlu0 %85
    %87 = vadd.xlane.f32.xlu0 %v84
    %v88 = vpop.xlane.xlu0 %87
    %v89 = vmax.f32 %v86, 1e-12
    %v90 = vmax.f32 %v88, 1e-12
    %v91 = vrsqrt.pop %v89
    %v92 = vrsqrt.pop %v90
    %v93 = vmul.f32 %v81, %v91
    %v94 = vmul.f32 %v82, %v92
    %95 = vst [vmem:[#allocation8] sm:$0xff] %v93
    %96 = vst [vmem:[#allocation8 + $0x8] sm:$0xff] %v94
    // Predicated region
    $region26: #{tpu_custom_call.1} parent=1 // pred_check
      _
    $region27: #{tpu_custom_call.1} parent=1 // pred_check_branch
      %98 = sbr.rel (0) target = $region29
    $region28: #{tpu_custom_call.1} parent=1 // pred_region
      %s100 = ssub.s32 256, 256
      %101 = vsyncadd [#allocation4], %s100
      %s102 = sshll.u32 [#allocation8], 4
      %s103 = int_to_ptr.vmem [resolvable:$true] %s102
      %108 = dma.vmem_to_hbm [thread:$0]  %s103, 256, %s3, [#allocation4], 128, 128, 8
    $region29: #{tpu_custom_call.1} parent=1 // pred_fallthru
      _
    // Predicated region
    $region30: #{tpu_custom_call.1} parent=1 // pred_check
      _
    $region31: #{tpu_custom_call.1} parent=1 // pred_check_branch
      %110 = sbr.rel (0) target = $region33
    $region32: #{tpu_custom_call.1} parent=1 // pred_region
      %111 = dma.done [#allocation4], 256
    $region33: #{tpu_custom_call.1} parent=1 // pred_fallthru
      _
    %112 = vsyncpa [#allocation3], 1
    %113 = vsyncpa [#allocation6], 1
    %114 = vsyncpa [#allocation4], 1

</llo_original>
